<compile_context>
chip_gen: v7x
topology: tpu7x:2x2x1
jax: 0.10.0
libtpu: 0.0.40
codegen_flags: <defaults>
</compile_context>

<pallas_src>
import jax
import jax.numpy as jnp
from jax.experimental import pallas as pl
from jax.experimental.pallas import tpu as pltpu


def _anfis_mf_kernel(x_ref, sel_ref, mean_ref, neg_inv_sig2_ref, out_ref):
    # x_ref:            (TB, D)    input tile
    # sel_ref:          (D, DMp)   one-hot expansion matrix: sel[d, d*M + m] = 1
    # mean_ref:         (1, DMp)   flattened means (0 in padded lanes)
    # neg_inv_sig2_ref: (1, DMp)   -1 / sigma^2    (0 in padded lanes)
    # out_ref:          (TB, DMp)  lane-dense flattened output tile
    xe = jnp.dot(
        x_ref[...],
        sel_ref[...],
        preferred_element_type=jnp.float32,
        # f32-faithful copy-expand; the matmul (contraction depth = D) is
        # negligible vs. the HBM store of the output block, so extra MXU passes
        # are free while keeping the test-tolerance accuracy.
        precision=jax.lax.Precision.HIGHEST,
    )                                                  # (TB, DMp)
    diff = xe - mean_ref[...]
    out_ref[...] = jnp.exp(diff * diff * neg_inv_sig2_ref[...]).astype(out_ref.dtype)


def _round_up(x, m):
    return (x + m - 1) // m * m


def _pick_vmem_limit_bytes():
    """Generation-aware scoped-VMEM limit: ~3/4 of physical VMEM, capped at 96 MiB.
    -> ~48 MiB on v7x (64 MiB physical), 96 MiB on v5e/v6e (128 MiB physical)."""
    cap = None
    try:
        cap = getattr(pltpu.get_tpu_info(), "vmem_capacity_bytes", None)
    except Exception:
        cap = None
    if not cap:
        cap = 64 * 1024 * 1024  # conservative (v7x-sized) fallback
    return int(min(cap * 3 // 4, 96 * 1024 * 1024))


def _choose_batch_tile(B, D, DMp, out_itemsize, vmem_limit_bytes, max_tile=1024):
    """Largest sublane-aligned batch tile that fits the VMEM budget.

    Accounts for everything resident in VMEM: the constant operands (sel, mean,
    -1/sigma^2; conservatively assumed double-buffered), the x block (lanes pad
    to 128), and the double-buffered output block.
    """
    resident = 2 * (D * DMp * 4 + 2 * DMp * 4)
    budget = max(vmem_limit_bytes - resident, 1 << 20)
    per_row = 2 * DMp * max(out_itemsize, 4) + 2 * _round_up(max(D, 1), 128) * 4
    cap = min(max(budget // per_row, 8), max_tile)
    cap = max(cap - cap % 8, 8)
    if B <= cap:
        if B >= 256:
            # Split into >= 2 steps: enables pipelining and gives both v7x
            # TensorCores work on the embarrassingly-parallel batch axis.
            return min(_round_up(-(-B // 2), 8), cap)
        # Tiny batch: one step; per-step overhead (~0.35 us) would dominate.
        return B
    return cap


def anfis_membership(x, mean, sigma, *, batch_tile=None, out_dtype=None):
    """out[b, d, m] = exp(-((x[b, d] - mean[d, m]) / sigma[d, m])**2)."""
    B, D = x.shape
    D2, M = mean.shape
    assert D == D2 and sigma.shape == (D, M)
    DM = D * M
    DMp = _round_up(DM, 128)  # lane-dense (full-width vst) output for any D*M
    out_dtype = x.dtype if out_dtype is None else jnp.dtype(out_dtype)
    out_itemsize = jnp.dtype(out_dtype).itemsize

    # Tiny (D*M) precomputations, done once in the wrapper.
    mean_flat = jnp.zeros((1, DMp), jnp.float32)
    mean_flat = mean_flat.at[:, :DM].set(mean.astype(jnp.float32).reshape(1, DM))
    # Padded lanes keep 0 here -> kernel computes exp(0) = 1 there; sliced off below.
    neg_inv_sig2 = jnp.zeros((1, DMp), jnp.float32)
    neg_inv_sig2 = neg_inv_sig2.at[:, :DM].set(
        (-1.0 / (sigma.astype(jnp.float32) ** 2)).reshape(1, DM))
    # One-hot selection matrix: column d*M + m picks x[:, d]; padded columns are 0.
    sel = (
        (jnp.arange(DMp, dtype=jnp.int32)[None, :] // M)
        == jnp.arange(D, dtype=jnp.int32)[:, None]
    ).astype(jnp.float32)  # (D, DMp)

    vmem_limit = _pick_vmem_limit_bytes()
    if batch_tile is None:
        batch_tile = _choose_batch_tile(B, D, DMp, out_itemsize, vmem_limit)
    grid = (pl.cdiv(B, batch_tile),)  # ragged last block is handled by Pallas

    cost = pl.CostEstimate(
        flops=int(2 * B * D * DMp + 3 * B * DMp),
        transcendentals=int(B * DMp),
        bytes_accessed=int(4 * (B * D + D * DMp + 2 * DMp) + out_itemsize * B * DMp),
    )

    # TODO(synk): for very large D*M (resident sel ~ D^2*M*4 bytes approaching
    # VMEM), add a second "parallel" grid axis tiling the flattened D*M dim.
    out_flat = pl.pallas_call(
        _anfis_mf_kernel,
        out_shape=jax.ShapeDtypeStruct((B, DMp), out_dtype),
        grid_spec=pltpu.PrefetchScalarGridSpec(
            num_scalar_prefetch=0,
            grid=grid,
            in_specs=[
                # x: tile over batch, full input_dim.
                pl.BlockSpec((batch_tile, D), lambda i: (i, 0)),
                # sel / mean / -1/sigma^2: tiny constants, same block every step.
                pl.BlockSpec((D, DMp), lambda i: (0, 0)),
                pl.BlockSpec((1, DMp), lambda i: (0, 0)),
                pl.BlockSpec((1, DMp), lambda i: (0, 0)),
            ],
            # Lane-dense output: last dim is a multiple of 128 by construction.
            out_specs=pl.BlockSpec((batch_tile, DMp), lambda i: (i, 0)),
        ),
        compiler_params=pltpu.CompilerParams(
            dimension_semantics=("parallel",),
            vmem_limit_bytes=int(vmem_limit),
        ),
        cost_estimate=cost,
    )(x.astype(jnp.float32), sel, mean_flat, neg_inv_sig2)

    out_flat = out_flat if DMp == DM else out_flat[:, :DM]
    # Free, contiguous reshape back to the PyTorch output layout.
    return out_flat.reshape(B, D, M)


def _reference(x, mean, sigma):
    return jnp.exp(-(((x[:, :, None] - mean[None, :, :]) / sigma[None, :, :]) ** 2))


if __name__ == "__main__":
    key = jax.random.PRNGKey(0)

    # Case 1: shapes consistent with the module's forward:
    #   batch=16, input_dim=8, num_membership_functions=16 (D*M == 128, one step).
    B, D, M = 16, 8, 16
    kx, km, ks, key = jax.random.split(key, 4)
    x = jax.random.normal(kx, (B, D), dtype=jnp.float32)
    # torch.rand -> uniform [0, 1); keep sigma away from 0 (sigma == 0 gives
    # inf/NaN exactly as in the PyTorch module).
    mean = jax.random.uniform(km, (D, M), dtype=jnp.float32)
    sigma = jax.random.uniform(ks, (D, M), dtype=jnp.float32, minval=0.1, maxval=1.0)
    out = jax.block_until_ready(anfis_membership(x, mean, sigma))
    assert out.shape == (B, D, M)
    assert jnp.allclose(out, _reference(x, mean, sigma), atol=1e-5, rtol=1e-5)

    # Case 2: non-128-multiple D*M (lane padding path) + ragged batch tiling
    # (cdiv grid with a partial last block).
    B2, D2, M2 = 20, 8, 5
    kx2, km2, ks2, key = jax.random.split(key, 4)
    x2 = jax.random.normal(kx2, (B2, D2), dtype=jnp.float32)
    mean2 = jax.random.uniform(km2, (D2, M2), dtype=jnp.float32)
    sigma2 = jax.random.uniform(ks2, (D2, M2), dtype=jnp.float32, minval=0.1, maxval=1.0)
    out2 = jax.block_until_ready(anfis_membership(x2, mean2, sigma2, batch_tile=8))
    assert out2.shape == (B2, D2, M2)
    assert jnp.allclose(out2, _reference(x2, mean2, sigma2), atol=1e-5, rtol=1e-5)

    print("KERNEL_OK")
</pallas_src>

<mosaic_0001>
module attributes {stable_mosaic.version = 11 : i64} {
  func.func @_anfis_mf_kernel(%arg0: i32, %arg1: memref<16x8xf32, #tpu.memory_space<vmem>>, %arg2: memref<8x128xf32, #tpu.memory_space<vmem>>, %arg3: memref<1x128xf32, #tpu.memory_space<vmem>>, %arg4: memref<1x128xf32, #tpu.memory_space<vmem>>, %arg5: memref<16x128xf32, #tpu.memory_space<vmem>>) attributes {dimension_semantics = [#tpu.dimension_semantics<parallel>], iteration_bounds = array<i64: 1>, scalar_prefetch = 0 : i64, scratch_operands = 0 : i64, tpu.core_type = #tpu.core_type<tc>, window_params = [{transform_indices = @transform_0, window_bounds = array<i64: 16, 8>}, {pipeline_mode = #tpu.pipeline_mode<synchronous>, transform_indices = @transform_1, window_bounds = array<i64: 8, 128>}, {pipeline_mode = #tpu.pipeline_mode<synchronous>, transform_indices = @transform_2, window_bounds = array<i64: 1, 128>}, {pipeline_mode = #tpu.pipeline_mode<synchronous>, transform_indices = @transform_3, window_bounds = array<i64: 1, 128>}, {transform_indices = @transform_4, window_bounds = array<i64: 16, 128>}]} {
    %c0 = arith.constant 0 : index
    %c0_0 = arith.constant 0 : index
    %0 = vector.load %arg1[%c0, %c0_0] : memref<16x8xf32, #tpu.memory_space<vmem>>, vector<16x8xf32>
    %c0_1 = arith.constant 0 : index
    %c0_2 = arith.constant 0 : index
    %1 = vector.load %arg2[%c0_1, %c0_2] : memref<8x128xf32, #tpu.memory_space<vmem>>, vector<8x128xf32>
    %cst = arith.constant dense<0.000000e+00> : vector<16x128xf32>
    %2 = tpu.matmul %0, %1, %cst {dimension_numbers = #tpu.dot_dimension_numbers<[1], [0], [0], [1], [0, 0, 1, 1], [], []>, precision = #tpu.contract_precision<fp32>} : vector<16x8xf32>, vector<8x128xf32>, vector<16x128xf32> -> vector<16x128xf32>
    %c0_3 = arith.constant 0 : index
    %c0_4 = arith.constant 0 : index
    %3 = vector.load %arg3[%c0_3, %c0_4] : memref<1x128xf32, #tpu.memory_space<vmem>>, vector<1x128xf32>
    %4 = vector.broadcast %3 : vector<1x128xf32> to vector<16x128xf32>
    %5 = arith.subf %2, %4 : vector<16x128xf32>
    %6 = arith.mulf %5, %5 : vector<16x128xf32>
    %c0_5 = arith.constant 0 : index
    %c0_6 = arith.constant 0 : index
    %7 = vector.load %arg4[%c0_5, %c0_6] : memref<1x128xf32, #tpu.memory_space<vmem>>, vector<1x128xf32>
    %8 = vector.broadcast %7 : vector<1x128xf32> to vector<16x128xf32>
    %9 = arith.mulf %6, %8 : vector<16x128xf32>
    %10 = math.exp %9 : vector<16x128xf32>
    %c0_7 = arith.constant 0 : index
    %c0_8 = arith.constant 0 : index
    %11 = vector.load %arg5[%c0_7, %c0_8] : memref<16x128xf32, #tpu.memory_space<vmem>>, vector<16x128xf32>
    tpu.vector_store %arg5[%c0_7, %c0_8], %10 {strides = array<i32>} : memref<16x128xf32, #tpu.memory_space<vmem>>, vector<16x128xf32>,
    return
  }
  func.func @transform_0(%arg0: i32) -> (i32, i32) {
    %c0_i32 = arith.constant 0 : i32
    %c0_i32_0 = arith.constant 0 : i32
    return %arg0, %c0_i32 : i32, i32
  }
  func.func @transform_1(%arg0: i32) -> (i32, i32) {
    %c0_i32 = arith.constant 0 : i32
    %c0_i32_0 = arith.constant 0 : i32
    %c0_i32_1 = arith.constant 0 : i32
    return %c0_i32, %c0_i32_0 : i32, i32
  }
  func.func @transform_2(%arg0: i32) -> (i32, i32) {
    %c0_i32 = arith.constant 0 : i32
    %c0_i32_0 = arith.constant 0 : i32
    %c0_i32_1 = arith.constant 0 : i32
    return %c0_i32, %c0_i32_0 : i32, i32
  }
  func.func @transform_3(%arg0: i32) -> (i32, i32) {
    %c0_i32 = arith.constant 0 : i32
    %c0_i32_0 = arith.constant 0 : i32
    %c0_i32_1 = arith.constant 0 : i32
    return %c0_i32, %c0_i32_0 : i32, i32
  }
  func.func @transform_4(%arg0: i32) -> (i32, i32) {
    %c0_i32 = arith.constant 0 : i32
    %c0_i32_0 = arith.constant 0 : i32
    return %arg0, %c0_i32 : i32, i32
  }
}

</mosaic_0001>

<llo_original>
// kernel: tpu_custom_call.1
$region0: #{tpu_custom_call.1}
  #allocation0 [shape = 'u32[]', space=smem, size = 0x4, offset = 0x4, fixed_abs, tag = 'smem constant byte address 0x4 - core index']
  #allocation1 [shape = 'u32[144,128]{1,0:T(1,128)}', space=vmem, size = 0x12000, scoped, tag = 'internal scratch']
  %s0 = inlined_call_operand.vmem [shape: f32[16,8], index: 0, kind: input, shape index: {}]
  %s1 = inlined_call_operand.vmem [shape: f32[8,128], index: 1, kind: input, shape index: {}]
  %s2 = inlined_call_operand.vmem [shape: f32[1,128], index: 2, kind: input, shape index: {}]
  %s3 = inlined_call_operand.vmem [shape: f32[1,128], index: 3, kind: input, shape index: {}]
  %s4 = inlined_call_operand.hbm [shape: f32[16,128], index: 4, kind: output, shape index: {}]
  %s5 = sld [smem:[#allocation0]]
  $region26: #{tpu_custom_call.1} parent=0
    _
  %s7 = ssub.s32 1, %s5
  %s8 = scalar_select 0, %s7, %s5
  $region1: #{tpu_custom_call.1} parent=0
    #allocation2 [shape = 'u8[8192]{0}', space=vmem, size = 0x2000, scoped, tag = 'output window, operand 0, single buffered']
    #allocation3 [shape = 's32[1]{0}', space=sflag, size = 0x4, scoped, tag = 'scoped memory for tpu_custom_call.1']
    %9 = vsyncpa [#allocation3], 0
    // Predicated region
    $region2: #{tpu_custom_call.1} parent=1 // pred_check
      _
    $region3: #{tpu_custom_call.1} parent=1 // pred_check_branch
      %11 = sbr.rel (0) target = $region5
    $region4: #{tpu_custom_call.1} parent=1 // pred_region
      _
    $region5: #{tpu_custom_call.1} parent=1 // pred_fallthru
      _
    // Predicated region
    $region6: #{tpu_custom_call.1} parent=1 // pred_check
      _
    $region7: #{tpu_custom_call.1} parent=1 // pred_check_branch
      %13 = sbr.rel (0) target = $region9
    $region8: #{tpu_custom_call.1} parent=1 // pred_region
      _
    $region9: #{tpu_custom_call.1} parent=1 // pred_fallthru
      _
    // Predicated region
    $region10: #{tpu_custom_call.1} parent=1 // pred_check
      _
    $region11: #{tpu_custom_call.1} parent=1 // pred_check_branch
      %15 = sbr.rel (0) target = $region13
    $region12: #{tpu_custom_call.1} parent=1 // pred_region
      _
    $region13: #{tpu_custom_call.1} parent=1 // pred_fallthru
      _
    // Predicated region
    $region14: #{tpu_custom_call.1} parent=1 // pred_check
      _
    $region15: #{tpu_custom_call.1} parent=1 // pred_check_branch
      %17 = sbr.rel (0) target = $region17
    $region16: #{tpu_custom_call.1} parent=1 // pred_region
      _
    $region17: #{tpu_custom_call.1} parent=1 // pred_fallthru
      _
    %v18 = vld [vmem:[%s0] sm:$0xff]
    %v19 = vld [vmem:[%s0 + $0x8] sm:$0xff]
    %v20 = vld [vmem:[%s1] sm:$0xff]
    %vm21 = vcmask 64512
    %v23 = vsel %vm21, %v18, 0
    %v26 = vsel %vm21, %v19, 0
    %28 = vmatprep.subr.mxu0 0.0
    %v29 = vand.u32 %v20, 4294901760
    %30 = vmatpush1.msra.mxu0 %v29
    %31 = vmatprep.subr.mxu0 0.0
    %32 = vmatpush1.msra.mxu0 0.0
    %33 = vmatprep.subr.mxu0 0.0
    %34 = vmatpush1.msra.mxu0 0.0
    %35 = vmatprep.subr.mxu0 0.0
    %36 = vmatpush1.msra.mxu0 0.0
    %37 = vmatprep.subr.mxu0 0.0
    %38 = vmatpush1.msra.mxu0 0.0
    %39 = vmatprep.subr.mxu0 0.0
    %40 = vmatpush1.msra.mxu0 0.0
    %41 = vmatprep.subr.mxu0 0.0
    %42 = vmatpush1.msra.mxu0 0.0
    %43 = vmatprep.subr.mxu0 0.0
    %44 = vmatpush1.msra.mxu0 0.0
    %45 = vmatprep.subr.mxu0 0.0
    %46 = vmatpush1.msra.mxu0 0.0
    %47 = vmatprep.subr.mxu0 0.0
    %48 = vmatpush1.msra.mxu0 0.0
    %49 = vmatprep.subr.mxu0 0.0
    %50 = vmatpush1.msra.mxu0 0.0
    %51 = vmatprep.subr.mxu0 0.0
    %52 = vmatpush1.msra.mxu0 0.0
    %53 = vmatprep.subr.mxu0 0.0
    %54 = vmatpush1.msra.mxu0 0.0
    %55 = vmatprep.subr.mxu0 0.0
    %56 = vmatpush1.msra.mxu0 0.0
    %57 = vmatprep.subr.mxu0 0.0
    %58 = vmatpush1.msra.mxu0 0.0
    %59 = vmatprep.subr.mxu0 0.0
    %60 = vmatpush1.msra.mxu0 0.0
    %61 = vmatprep.subr.mxu0 0.0
    %62 = vmatpush1.msra.mxu0 0.0
    %63 = vmatprep.subr.mxu0 0.0
    %64 = vmatpush1.msra.mxu0 0.0
    %65 = vmatprep.subr.mxu0 0.0
    %66 = vmatpush1.msra.mxu0 0.0
    %67 = vmatprep.subr.mxu0 0.0
    %68 = vmatpush1.msra.mxu0 0.0
    %69 = vmatprep.subr.mxu0 0.0
    %70 = vmatpush1.msra.mxu0 0.0
    %71 = vmatprep.subr.mxu0 0.0
    %72 = vmatpush1.msra.mxu0 0.0
    %73 = vmatprep.subr.mxu0 0.0
    %74 = vmatpush1.msra.mxu0 0.0
    %75 = vmatprep.subr.mxu0 0.0
    %76 = vmatpush1.msra.mxu0 0.0
    %77 = vmatprep.subr.mxu0 0.0
    %78 = vmatpush1.msra.mxu0 0.0
    %79 = vmatprep.subr.mxu0 0.0
    %80 = vmatpush1.msra.mxu0 0.0
    %81 = vmatprep.subr.mxu0 0.0
    %82 = vmatpush1.msra.mxu0 0.0
    %83 = vmatprep.subr.mxu0 0.0
    %84 = vmatpush1.msra.mxu0 0.0
    %85 = vmatprep.subr.mxu0 0.0
    %86 = vmatpush1.msra.mxu0 0.0
    %87 = vmatprep.subr.mxu0 0.0
    %88 = vmatpush1.msra.mxu0 0.0
    %89 = vmatprep.subr.mxu0 0.0
    %90 = vmatpush1.msra.mxu0 0.0
    %91 = vmatprep.subr.mxu0 0.0
    %92 = vmatpush1.msra.mxu0 0.0
    %93 = vmatprep.mubr.f32.mxu0 0.0
    %v94 = vand.u32 %v23, 4294901760
    %v95 = vsub.f32 %v23, %v94
    %v96 = vand.u32 %v95, 4294901760
    %v97 = vsub.f32 %v95, %v96
    %v98 = vand.u32 %v97, 4294901760
    %99 = vmatmul.mubr.f32.gmra.mrb[0].mxu0 %v98
    %v100 = vpop.f32.mrb[0].mxu0
    %v101 = vadd.f32 0.0, %v100
    %v102 = vpop.f32.mrb[0].mxu0
    %103 = vmatprep.mubr.f32.mxu0 0.0
    %v104 = vand.u32 %v26, 4294901760
    %v105 = vsub.f32 %v26, %v104
    %v106 = vand.u32 %v105, 4294901760
    %v107 = vsub.f32 %v105, %v106
    %v108 = vand.u32 %v107, 4294901760
    %109 = vmatmul.mubr.f32.gmra.mrb[0].mxu0 %v108
    %v110 = vpop.f32.mrb[0].mxu0
    %v111 = vadd.f32 0.0, %v110
    %v112 = vpop.f32.mrb[0].mxu0
    %113 = vdwg.mxu0
    %114 = vmatprep.subr.mxu0 0.0
    %v115 = vand.u32 %v20, 4294901760
    %v116 = vsub.f32 %v20, %v115
    %v117 = vand.u32 %v116, 4294901760
    %v118 = vsub.f32 %v116, %v117
    %v119 = vand.u32 %v118, 4294901760
    %120 = vmatpush1.msra.mxu0 %v119
    %121 = vmatprep.subr.mxu0 0.0
    %122 = vmatpush1.msra.mxu0 0.0
    %123 = vmatprep.subr.mxu0 0.0
    %124 = vmatpush1.msra.mxu0 0.0
    %125 = vmatprep.subr.mxu0 0.0
    %126 = vmatpush1.msra.mxu0 0.0
    %127 = vmatprep.subr.mxu0 0.0
    %128 = vmatpush1.msra.mxu0 0.0
    %129 = vmatprep.subr.mxu0 0.0
    %130 = vmatpush1.msra.mxu0 0.0
    %131 = vmatprep.subr.mxu0 0.0
    %132 = vmatpush1.msra.mxu0 0.0
    %133 = vmatprep.subr.mxu0 0.0
    %134 = vmatpush1.msra.mxu0 0.0
    %135 = vmatprep.subr.mxu0 0.0
    %136 = vmatpush1.msra.mxu0 0.0
    %137 = vmatprep.subr.mxu0 0.0
    %138 = vmatpush1.msra.mxu0 0.0
    %139 = vmatprep.subr.mxu0 0.0
    %140 = vmatpush1.msra.mxu0 0.0
    %141 = vmatprep.subr.mxu0 0.0
    %142 = vmatpush1.msra.mxu0 0.0
    %143 = vmatprep.subr.mxu0 0.0
    %144 = vmatpush1.msra.mxu0 0.0
    %145 = vmatprep.subr.mxu0 0.0
    %146 = vmatpush1.msra.mxu0 0.0
    %147 = vmatprep.subr.mxu0 0.0
    %148 = vmatpush1.msra.mxu0 0.0
    %149 = vmatprep.subr.mxu0 0.0
    %150 = vmatpush1.msra.mxu0 0.0
    %151 = vmatprep.subr.mxu0 0.0
    %152 = vmatpush1.msra.mxu0 0.0
    %153 = vmatprep.subr.mxu0 0.0
    %154 = vmatpush1.msra.mxu0 0.0
    %155 = vmatprep.subr.mxu0 0.0
    %156 = vmatpush1.msra.mxu0 0.0
    %157 = vmatprep.subr.mxu0 0.0
    %158 = vmatpush1.msra.mxu0 0.0
    %159 = vmatprep.subr.mxu0 0.0
    %160 = vmatpush1.msra.mxu0 0.0
    %161 = vmatprep.subr.mxu0 0.0
    %162 = vmatpush1.msra.mxu0 0.0
    %163 = vmatprep.subr.mxu0 0.0
    %164 = vmatpush1.msra.mxu0 0.0
    %165 = vmatprep.subr.mxu0 0.0
    %166 = vmatpush1.msra.mxu0 0.0
    %167 = vmatprep.subr.mxu0 0.0
    %168 = vmatpush1.msra.mxu0 0.0
    %169 = vmatprep.subr.mxu0 0.0
    %170 = vmatpush1.msra.mxu0 0.0
    %171 = vmatprep.subr.mxu0 0.0
    %172 = vmatpush1.msra.mxu0 0.0
    %173 = vmatprep.subr.mxu0 0.0
    %174 = vmatpush1.msra.mxu0 0.0
    %175 = vmatprep.subr.mxu0 0.0
    %176 = vmatpush1.msra.mxu0 0.0
    %177 = vmatprep.subr.mxu0 0.0
    %178 = vmatpush1.msra.mxu0 0.0
    %179 = vmatprep.subr.mxu0 0.0
    %180 = vmatpush1.msra.mxu0 0.0
    %181 = vmatprep.subr.mxu0 0.0
    %182 = vmatpush1.msra.mxu0 0.0
    %183 = vmatprep.mubr.f32.mxu0 0.0
    %v184 = vand.u32 %v23, 4294901760
    %185 = vmatmul.mubr.f32.gmra.mrb[0].mxu0 %v184
    %v186 = vpop.f32.mrb[0].mxu0
    %v187 = vadd.f32 %v101, %v186
    %v188 = vpop.f32.mrb[0].mxu0
    %189 = vmatprep.mubr.f32.mxu0 0.0
    %v190 = vand.u32 %v26, 4294901760
    %191 = vmatmul.mubr.f32.gmra.mrb[0].mxu0 %v190
    %v192 = vpop.f32.mrb[0].mxu0
    %v193 = vadd.f32 %v111, %v192
    %v194 = vpop.f32.mrb[0].mxu0
    %195 = vdwg.mxu0
    %196 = vmatprep.subr.mxu0 0.0
    %v197 = vand.u32 %v20, 4294901760
    %v198 = vsub.f32 %v20, %v197
    %199 = vmatpush1.msra.mxu0 %v198
    %200 = vmatprep.subr.mxu0 0.0
    %201 = vmatpush1.msra.mxu0 0.0
    %202 = vmatprep.subr.mxu0 0.0
    %203 = vmatpush1.msra.mxu0 0.0
    %204 = vmatprep.subr.mxu0 0.0
    %205 = vmatpush1.msra.mxu0 0.0
    %206 = vmatprep.subr.mxu0 0.0
    %207 = vmatpush1.msra.mxu0 0.0
    %208 = vmatprep.subr.mxu0 0.0
    %209 = vmatpush1.msra.mxu0 0.0
    %210 = vmatprep.subr.mxu0 0.0
    %211 = vmatpush1.msra.mxu0 0.0
    %212 = vmatprep.subr.mxu0 0.0
    %213 = vmatpush1.msra.mxu0 0.0
    %214 = vmatprep.subr.mxu0 0.0
    %215 = vmatpush1.msra.mxu0 0.0
    %216 = vmatprep.subr.mxu0 0.0
    %217 = vmatpush1.msra.mxu0 0.0
    %218 = vmatprep.subr.mxu0 0.0
    %219 = vmatpush1.msra.mxu0 0.0
    %220 = vmatprep.subr.mxu0 0.0
    %221 = vmatpush1.msra.mxu0 0.0
    %222 = vmatprep.subr.mxu0 0.0
    %223 = vmatpush1.msra.mxu0 0.0
    %224 = vmatprep.subr.mxu0 0.0
    %225 = vmatpush1.msra.mxu0 0.0
    %226 = vmatprep.subr.mxu0 0.0
    %227 = vmatpush1.msra.mxu0 0.0
    %228 = vmatprep.subr.mxu0 0.0
    %229 = vmatpush1.msra.mxu0 0.0
    %230 = vmatprep.subr.mxu0 0.0
    %231 = vmatpush1.msra.mxu0 0.0
    %232 = vmatprep.subr.mxu0 0.0
    %233 = vmatpush1.msra.mxu0 0.0
    %234 = vmatprep.subr.mxu0 0.0
    %235 = vmatpush1.msra.mxu0 0.0
    %236 = vmatprep.subr.mxu0 0.0
    %237 = vmatpush1.msra.mxu0 0.0
    %238 = vmatprep.subr.mxu0 0.0
    %239 = vmatpush1.msra.mxu0 0.0
    %240 = vmatprep.subr.mxu0 0.0
    %241 = vmatpush1.msra.mxu0 0.0
    %242 = vmatprep.subr.mxu0 0.0
    %243 = vmatpush1.msra.mxu0 0.0
    %244 = vmatprep.subr.mxu0 0.0
    %245 = vmatpush1.msra.mxu0 0.0
    %246 = vmatprep.subr.mxu0 0.0
    %247 = vmatpush1.msra.mxu0 0.0
    %248 = vmatprep.subr.mxu0 0.0
    %249 = vmatpush1.msra.mxu0 0.0
    %250 = vmatprep.subr.mxu0 0.0
    %251 = vmatpush1.msra.mxu0 0.0
    %252 = vmatprep.subr.mxu0 0.0
    %253 = vmatpush1.msra.mxu0 0.0
    %254 = vmatprep.subr.mxu0 0.0
    %255 = vmatpush1.msra.mxu0 0.0
    %256 = vmatprep.subr.mxu0 0.0
    %257 = vmatpush1.msra.mxu0 0.0
    %258 = vmatprep.subr.mxu0 0.0
    %259 = vmatpush1.msra.mxu0 0.0
    %260 = vmatprep.subr.mxu0 0.0
    %261 = vmatpush1.msra.mxu0 0.0
    %262 = vmatprep.mubr.f32.mxu0 0.0
    %v263 = vand.u32 %v23, 4294901760
    %v264 = vsub.f32 %v23, %v263
    %265 = vmatmul.mubr.f32.gmra.mrb[0].mxu0 %v264
    %v266 = vpop.f32.mrb[0].mxu0
    %v267 = vadd.f32 %v187, %v266
    %v268 = vpop.f32.mrb[0].mxu0
    %269 = vmatprep.mubr.f32.mxu0 0.0
    %v270 = vand.u32 %v26, 4294901760
    %v271 = vsub.f32 %v26, %v270
    %272 = vmatmul.mubr.f32.gmra.mrb[0].mxu0 %v271
    %v273 = vpop.f32.mrb[0].mxu0
    %v274 = vadd.f32 %v193, %v273
    %v275 = vpop.f32.mrb[0].mxu0
    %276 = vdwg.mxu0
    %277 = vmatprep.subr.mxu0 0.0
    %v278 = vand.u32 %v20, 4294901760
    %279 = vmatpush1.msra.mxu0 %v278
    %280 = vmatprep.subr.mxu0 0.0
    %281 = vmatpush1.msra.mxu0 0.0
    %282 = vmatprep.subr.mxu0 0.0
    %283 = vmatpush1.msra.mxu0 0.0
    %284 = vmatprep.subr.mxu0 0.0
    %285 = vmatpush1.msra.mxu0 0.0
    %286 = vmatprep.subr.mxu0 0.0
    %287 = vmatpush1.msra.mxu0 0.0
    %288 = vmatprep.subr.mxu0 0.0
    %289 = vmatpush1.msra.mxu0 0.0
    %290 = vmatprep.subr.mxu0 0.0
    %291 = vmatpush1.msra.mxu0 0.0
    %292 = vmatprep.subr.mxu0 0.0
    %293 = vmatpush1.msra.mxu0 0.0
    %294 = vmatprep.subr.mxu0 0.0
    %295 = vmatpush1.msra.mxu0 0.0
    %296 = vmatprep.subr.mxu0 0.0
    %297 = vmatpush1.msra.mxu0 0.0
    %298 = vmatprep.subr.mxu0 0.0
    %299 = vmatpush1.msra.mxu0 0.0
    %300 = vmatprep.subr.mxu0 0.0
    %301 = vmatpush1.msra.mxu0 0.0
    %302 = vmatprep.subr.mxu0 0.0
    %303 = vmatpush1.msra.mxu0 0.0
    %304 = vmatprep.subr.mxu0 0.0
    %305 = vmatpush1.msra.mxu0 0.0
    %306 = vmatprep.subr.mxu0 0.0
    %307 = vmatpush1.msra.mxu0 0.0
    %308 = vmatprep.subr.mxu0 0.0
    %309 = vmatpush1.msra.mxu0 0.0
    %310 = vmatprep.subr.mxu0 0.0
    %311 = vmatpush1.msra.mxu0 0.0
    %312 = vmatprep.subr.mxu0 0.0
    %313 = vmatpush1.msra.mxu0 0.0
    %314 = vmatprep.subr.mxu0 0.0
    %315 = vmatpush1.msra.mxu0 0.0
    %316 = vmatprep.subr.mxu0 0.0
    %317 = vmatpush1.msra.mxu0 0.0
    %318 = vmatprep.subr.mxu0 0.0
    %319 = vmatpush1.msra.mxu0 0.0
    %320 = vmatprep.subr.mxu0 0.0
    %321 = vmatpush1.msra.mxu0 0.0
    %322 = vmatprep.subr.mxu0 0.0
    %323 = vmatpush1.msra.mxu0 0.0
    %324 = vmatprep.subr.mxu0 0.0
    %325 = vmatpush1.msra.mxu0 0.0
    %326 = vmatprep.subr.mxu0 0.0
    %327 = vmatpush1.msra.mxu0 0.0
    %328 = vmatprep.subr.mxu0 0.0
    %329 = vmatpush1.msra.mxu0 0.0
    %330 = vmatprep.subr.mxu0 0.0
    %331 = vmatpush1.msra.mxu0 0.0
    %332 = vmatprep.subr.mxu0 0.0
    %333 = vmatpush1.msra.mxu0 0.0
    %334 = vmatprep.subr.mxu0 0.0
    %335 = vmatpush1.msra.mxu0 0.0
    %336 = vmatprep.subr.mxu0 0.0
    %337 = vmatpush1.msra.mxu0 0.0
    %338 = vmatprep.subr.mxu0 0.0
    %339 = vmatpush1.msra.mxu0 0.0
    %340 = vmatprep.subr.mxu0 0.0
    %341 = vmatpush1.msra.mxu0 0.0
    %342 = vmatprep.mubr.f32.mxu0 0.0
    %v343 = vand.u32 %v23, 4294901760
    %v344 = vsub.f32 %v23, %v343
    %v345 = vand.u32 %v344, 4294901760
    %346 = vmatmul.mubr.f32.gmra.mrb[0].mxu0 %v345
    %v347 = vpop.f32.mrb[0].mxu0
    %v348 = vadd.f32 %v267, %v347
    %v349 = vpop.f32.mrb[0].mxu0
    %350 = vmatprep.mubr.f32.mxu0 0.0
    %v351 = vand.u32 %v26, 4294901760
    %v352 = vsub.f32 %v26, %v351
    %v353 = vand.u32 %v352, 4294901760
    %354 = vmatmul.mubr.f32.gmra.mrb[0].mxu0 %v353
    %v355 = vpop.f32.mrb[0].mxu0
    %v356 = vadd.f32 %v274, %v355
    %v357 = vpop.f32.mrb[0].mxu0
    %358 = vdwg.mxu0
    %359 = vmatprep.subr.mxu0 0.0
    %v360 = vand.u32 %v20, 4294901760
    %v361 = vsub.f32 %v20, %v360
    %v362 = vand.u32 %v361, 4294901760
    %363 = vmatpush1.msra.mxu0 %v362
    %364 = vmatprep.subr.mxu0 0.0
    %365 = vmatpush1.msra.mxu0 0.0
    %366 = vmatprep.subr.mxu0 0.0
    %367 = vmatpush1.msra.mxu0 0.0
    %368 = vmatprep.subr.mxu0 0.0
    %369 = vmatpush1.msra.mxu0 0.0
    %370 = vmatprep.subr.mxu0 0.0
    %371 = vmatpush1.msra.mxu0 0.0
    %372 = vmatprep.subr.mxu0 0.0
    %373 = vmatpush1.msra.mxu0 0.0
    %374 = vmatprep.subr.mxu0 0.0
    %375 = vmatpush1.msra.mxu0 0.0
    %376 = vmatprep.subr.mxu0 0.0
    %377 = vmatpush1.msra.mxu0 0.0
    %378 = vmatprep.subr.mxu0 0.0
    %379 = vmatpush1.msra.mxu0 0.0
    %380 = vmatprep.subr.mxu0 0.0
    %381 = vmatpush1.msra.mxu0 0.0
    %382 = vmatprep.subr.mxu0 0.0
    %383 = vmatpush1.msra.mxu0 0.0
    %384 = vmatprep.subr.mxu0 0.0
    %385 = vmatpush1.msra.mxu0 0.0
    %386 = vmatprep.subr.mxu0 0.0
    %387 = vmatpush1.msra.mxu0 0.0
    %388 = vmatprep.subr.mxu0 0.0
    %389 = vmatpush1.msra.mxu0 0.0
    %390 = vmatprep.subr.mxu0 0.0
    %391 = vmatpush1.msra.mxu0 0.0
    %392 = vmatprep.subr.mxu0 0.0
    %393 = vmatpush1.msra.mxu0 0.0
    %394 = vmatprep.subr.mxu0 0.0
    %395 = vmatpush1.msra.mxu0 0.0
    %396 = vmatprep.subr.mxu0 0.0
    %397 = vmatpush1.msra.mxu0 0.0
    %398 = vmatprep.subr.mxu0 0.0
    %399 = vmatpush1.msra.mxu0 0.0
    %400 = vmatprep.subr.mxu0 0.0
    %401 = vmatpush1.msra.mxu0 0.0
    %402 = vmatprep.subr.mxu0 0.0
    %403 = vmatpush1.msra.mxu0 0.0
    %404 = vmatprep.subr.mxu0 0.0
    %405 = vmatpush1.msra.mxu0 0.0
    %406 = vmatprep.subr.mxu0 0.0
    %407 = vmatpush1.msra.mxu0 0.0
    %408 = vmatprep.subr.mxu0 0.0
    %409 = vmatpush1.msra.mxu0 0.0
    %410 = vmatprep.subr.mxu0 0.0
    %411 = vmatpush1.msra.mxu0 0.0
    %412 = vmatprep.subr.mxu0 0.0
    %413 = vmatpush1.msra.mxu0 0.0
    %414 = vmatprep.subr.mxu0 0.0
    %415 = vmatpush1.msra.mxu0 0.0
    %416 = vmatprep.subr.mxu0 0.0
    %417 = vmatpush1.msra.mxu0 0.0
    %418 = vmatprep.subr.mxu0 0.0
    %419 = vmatpush1.msra.mxu0 0.0
    %420 = vmatprep.subr.mxu0 0.0
    %421 = vmatpush1.msra.mxu0 0.0
    %422 = vmatprep.subr.mxu0 0.0
    %423 = vmatpush1.msra.mxu0 0.0
    %424 = vmatprep.subr.mxu0 0.0
    %425 = vmatpush1.msra.mxu0 0.0
    %426 = vmatprep.mubr.f32.mxu0 0.0
    %v427 = vand.u32 %v23, 4294901760
    %428 = vmatmul.mubr.f32.gmra.mrb[0].mxu0 %v427
    %v429 = vpop.f32.mrb[0].mxu0
    %v430 = vadd.f32 %v348, %v429
    %v431 = vpop.f32.mrb[0].mxu0
    %432 = vmatprep.mubr.f32.mxu0 0.0
    %v433 = vand.u32 %v26, 4294901760
    %434 = vmatmul.mubr.f32.gmra.mrb[0].mxu0 %v433
    %v435 = vpop.f32.mrb[0].mxu0
    %v436 = vadd.f32 %v356, %v435
    %v437 = vpop.f32.mrb[0].mxu0
    %438 = vdwg.mxu0
    %439 = vmatprep.subr.mxu0 0.0
    %v440 = vand.u32 %v20, 4294901760
    %441 = vmatpush1.msra.mxu0 %v440
    %442 = vmatprep.subr.mxu0 0.0
    %443 = vmatpush1.msra.mxu0 0.0
    %444 = vmatprep.subr.mxu0 0.0
    %445 = vmatpush1.msra.mxu0 0.0
    %446 = vmatprep.subr.mxu0 0.0
    %447 = vmatpush1.msra.mxu0 0.0
    %448 = vmatprep.subr.mxu0 0.0
    %449 = vmatpush1.msra.mxu0 0.0
    %450 = vmatprep.subr.mxu0 0.0
    %451 = vmatpush1.msra.mxu0 0.0
    %452 = vmatprep.subr.mxu0 0.0
    %453 = vmatpush1.msra.mxu0 0.0
    %454 = vmatprep.subr.mxu0 0.0
    %455 = vmatpush1.msra.mxu0 0.0
    %456 = vmatprep.subr.mxu0 0.0
    %457 = vmatpush1.msra.mxu0 0.0
    %458 = vmatprep.subr.mxu0 0.0
    %459 = vmatpush1.msra.mxu0 0.0
    %460 = vmatprep.subr.mxu0 0.0
    %461 = vmatpush1.msra.mxu0 0.0
    %462 = vmatprep.subr.mxu0 0.0
    %463 = vmatpush1.msra.mxu0 0.0
    %464 = vmatprep.subr.mxu0 0.0
    %465 = vmatpush1.msra.mxu0 0.0
    %466 = vmatprep.subr.mxu0 0.0
    %467 = vmatpush1.msra.mxu0 0.0
    %468 = vmatprep.subr.mxu0 0.0
    %469 = vmatpush1.msra.mxu0 0.0
    %470 = vmatprep.subr.mxu0 0.0
    %471 = vmatpush1.msra.mxu0 0.0
    %472 = vmatprep.subr.mxu0 0.0
    %473 = vmatpush1.msra.mxu0 0.0
    %474 = vmatprep.subr.mxu0 0.0
    %475 = vmatpush1.msra.mxu0 0.0
    %476 = vmatprep.subr.mxu0 0.0
    %477 = vmatpush1.msra.mxu0 0.0
    %478 = vmatprep.subr.mxu0 0.0
    %479 = vmatpush1.msra.mxu0 0.0
    %480 = vmatprep.subr.mxu0 0.0
    %481 = vmatpush1.msra.mxu0 0.0
    %482 = vmatprep.subr.mxu0 0.0
    %483 = vmatpush1.msra.mxu0 0.0
    %484 = vmatprep.subr.mxu0 0.0
    %485 = vmatpush1.msra.mxu0 0.0
    %486 = vmatprep.subr.mxu0 0.0
    %487 = vmatpush1.msra.mxu0 0.0
    %488 = vmatprep.subr.mxu0 0.0
    %489 = vmatpush1.msra.mxu0 0.0
    %490 = vmatprep.subr.mxu0 0.0
    %491 = vmatpush1.msra.mxu0 0.0
    %492 = vmatprep.subr.mxu0 0.0
    %493 = vmatpush1.msra.mxu0 0.0
    %494 = vmatprep.subr.mxu0 0.0
    %495 = vmatpush1.msra.mxu0 0.0
    %496 = vmatprep.subr.mxu0 0.0
    %497 = vmatpush1.msra.mxu0 0.0
    %498 = vmatprep.subr.mxu0 0.0
    %499 = vmatpush1.msra.mxu0 0.0
    %500 = vmatprep.subr.mxu0 0.0
    %501 = vmatpush1.msra.mxu0 0.0
    %502 = vmatprep.subr.mxu0 0.0
    %503 = vmatpush1.msra.mxu0 0.0
    %504 = vmatprep.mubr.f32.mxu0 0.0
    %v505 = vand.u32 %v23, 4294901760
    %506 = vmatmul.mubr.f32.gmra.mrb[0].mxu0 %v505
    %v507 = vpop.f32.mrb[0].mxu0
    %v508 = vadd.f32 %v430, %v507
    %v509 = vpop.f32.mrb[0].mxu0
    %510 = vmatprep.mubr.f32.mxu0 0.0
    %v511 = vand.u32 %v26, 4294901760
    %512 = vmatmul.mubr.f32.gmra.mrb[0].mxu0 %v511
    %v513 = vpop.f32.mrb[0].mxu0
    %v514 = vadd.f32 %v436, %v513
    %v515 = vpop.f32.mrb[0].mxu0
    %516 = vdwg.mxu0
    %v517 = vld [vmem:[%s2] sm:$0x1]
    %v519 = vlaneseq
    %v520 = vshrl.u32 %v519, 7
    %v521 = vsub.s32 0, %v520
    %v522 = vrot.slane %v517, %v521
    %v524 = vsub.f32 %v508, %v522
    %v525 = vsub.f32 %v514, %v522
    %v526 = vmul.f32 %v524, %v524
    %v527 = vmul.f32 %v525, %v525
    %v528 = vld [vmem:[%s3] sm:$0x1]
    %v530 = vlaneseq
    %v531 = vshrl.u32 %v530, 7
    %v532 = vsub.s32 0, %v531
    %v533 = vrot.slane %v528, %v532
    %v535 = vmul.f32 %v526, %v533
    %v536 = vmul.f32 %v527, %v533
    %v537 = vmul.f32 %v535, 1.442695
    %v538 = vpow.pop %v537
    %v539 = vmul.f32 %v536, 1.442695
    %v540 = vpow.pop %v539
    %541 = vst [vmem:[#allocation2] sm:$0xff] %v538
    %542 = vst [vmem:[#allocation2 + $0x8] sm:$0xff] %v540
    // Predicated region
    $region18: #{tpu_custom_call.1} parent=1 // pred_check
      _
    $region19: #{tpu_custom_call.1} parent=1 // pred_check_branch
      %544 = sbr.rel (0) target = $region21
    $region20: #{tpu_custom_call.1} parent=1 // pred_region
      %s546 = ssub.s32 256, 256
      %547 = vsyncadd [#allocation3], %s546
      %s548 = sshll.u32 [#allocation2], 4
      %s549 = int_to_ptr.vmem [resolvable:$true] %s548
      %554 = dma.vmem_to_hbm [thread:$0]  %s549, 256, %s4, [#allocation3], 128, 128, 8
    $region21: #{tpu_custom_call.1} parent=1 // pred_fallthru
      _
    // Predicated region
    $region22: #{tpu_custom_call.1} parent=1 // pred_check
      _
    $region23: #{tpu_custom_call.1} parent=1 // pred_check_branch
      %556 = sbr.rel (0) target = $region25
    $region24: #{tpu_custom_call.1} parent=1 // pred_region
      %557 = dma.done [#allocation3], 256
    $region25: #{tpu_custom_call.1} parent=1 // pred_fallthru
      _
    %558 = vsyncpa [#allocation3], 1

</llo_original>
